<compile_context>
chip_gen: v5e
topology: v5e:2x2
jax: 0.10.0
libtpu: 0.0.40
codegen_flags: <defaults>
</compile_context>

<pallas_src>
import jax
import jax.numpy as jnp
from jax.experimental import pallas as pl
from jax.experimental.pallas import tpu as pltpu


def _round_up(v, m):
    return ((v + m - 1) // m) * m


def _sublane(dtype):
    # Second-minor block granularity is dtype dependent (sub-32-bit packs sublanes).
    itemsize = jnp.dtype(dtype).itemsize
    if itemsize >= 4:
        return 8
    if itemsize == 2:
        return 16
    return 32


# ---------------------------------------------------------------------------
# Kernels
# ---------------------------------------------------------------------------
def _resident_kernel(x_ref, wt_ref, b_ref, o_ref):
    # x_ref: (tm, K) streamed; wt_ref: (K, N) resident; b_ref: (1, N); o_ref: (tm, N)
    acc = jnp.dot(x_ref[...], wt_ref[...], preferred_element_type=jnp.float32)
    o_ref[...] = (acc + b_ref[...].astype(jnp.float32)).astype(o_ref.dtype)


def _tiled_kernel_f32_out(x_ref, wt_ref, b_ref, o_ref):
    # f32 output block doubles as the accumulator (resident across the K axis).
    k = pl.program_id(2)

    @pl.when(k == 0)
    def _():
        o_ref[...] = jnp.zeros_like(o_ref)

    o_ref[...] += jnp.dot(x_ref[...], wt_ref[...], preferred_element_type=jnp.float32)

    @pl.when(k == pl.num_programs(2) - 1)
    def _():
        o_ref[...] += b_ref[...].astype(jnp.float32)


def _tiled_kernel_acc(x_ref, wt_ref, b_ref, o_ref, acc_ref):
    # Non-f32 outputs: accumulate in a f32 VMEM scratch, cast on finalize.
    k = pl.program_id(2)

    @pl.when(k == 0)
    def _():
        acc_ref[...] = jnp.zeros_like(acc_ref)

    acc_ref[...] += jnp.dot(x_ref[...], wt_ref[...], preferred_element_type=jnp.float32)

    @pl.when(k == pl.num_programs(2) - 1)
    def _():
        o_ref[...] = (acc_ref[...] + b_ref[...].astype(jnp.float32)).astype(o_ref.dtype)


# ---------------------------------------------------------------------------
# One-time setup (parameter prep) + hot-path apply()
# ---------------------------------------------------------------------------
def make_embedding_projector(weight, bias, *, compute_dtype=None,
                             tm=512, tn=512, tk=512,
                             resident_vmem_budget=28 * 1024 * 1024,
                             force_tiled=False):
    """
    One-time setup for  y = x @ weight.T + bias  (torch.nn.Linear semantics).

    weight: (output_dim, input_dim)  -- native PyTorch layout
    bias:   (output_dim,)
    Returns apply(x): (M, input_dim) -> (M, output_dim).
    Call this once per parameter set and reuse apply() -- all transposition /
    padding happens here, never in the per-call hot path.
    """
    weight = jnp.asarray(weight)
    bias = jnp.asarray(bias)
    N, K = weight.shape
    assert bias.shape == (N,), "bias shape mismatch"

    if compute_dtype is not None:
        weight = weight.astype(compute_dtype)
    wt = weight.T                       # (K, N): one-time transpose of a parameter
    b2 = bias.reshape(1, N)             # bias kept in its own dtype; epilogue is f32

    w_itemsize = jnp.dtype(wt.dtype).itemsize
    w_bytes = K * N * w_itemsize
    # Conservative per-call VMEM estimate for the resident path: weight counted
    # twice (pipelining slack), double-buffered x/out tiles at <=4 B/elem.
    resident_est = 2 * w_bytes + 2 * tm * K * 4 + 2 * tm * N * 4 + (1 << 20)
    use_resident = (not force_tiled) and resident_est <= resident_vmem_budget

    if use_resident:
        # 32 MiB is within scoped/physical VMEM on v5e/v6e and v7x (64 MiB phys).
        vmem_limit = 32 * 1024 * 1024

        @jax.jit
        def apply(x):
            M, Kx = x.shape
            assert Kx == K, "input feature dim mismatch"
            out_dtype = x.dtype
            if compute_dtype is not None:
                x = x.astype(compute_dtype)
            tm_eff = M if M <= tm else _round_up(tm, _sublane(x.dtype))
            grid = (pl.cdiv(M, tm_eff),)   # >=2 blocks -> shards across v7x's 2 TCs
            return pl.pallas_call(
                _resident_kernel,
                out_shape=jax.ShapeDtypeStruct((M, N), out_dtype),
                grid_spec=pltpu.PrefetchScalarGridSpec(
                    num_scalar_prefetch=0,
                    grid=grid,
                    in_specs=[
                        pl.BlockSpec((tm_eff, K), lambda i: (i, 0)),  # x: streamed
                        pl.BlockSpec((K, N), lambda i: (0, 0)),       # weight: resident
                        pl.BlockSpec((1, N), lambda i: (0, 0)),       # bias: resident
                    ],
                    out_specs=pl.BlockSpec((tm_eff, N), lambda i: (i, 0)),
                ),
                compiler_params=pltpu.CompilerParams(
                    dimension_semantics=("parallel",),
                    vmem_limit_bytes=vmem_limit,
                ),
            )(x, wt, b2)

        return apply

    # ---- Tiled fallback for large weights: (M, N, K) grid --------------------
    # Full-dim blocks for small N/K (always layout-legal); otherwise 256-multiple
    # tiles to fill the v6e/v7x 256x256 MXU.  Only K (the contraction) ever needs
    # zero padding; ragged M/N edge blocks are masked by Pallas.
    tn_eff = N if N <= tn else tn
    tk_eff = K if K <= tk else tk
    Kp = K if tk_eff == K else _round_up(K, tk_eff)
    wt_p = wt if Kp == K else jnp.pad(wt, ((0, Kp - K), (0, 0)))   # one-time prep

    tile_bytes = (2 * tm * tk_eff * 4 + 2 * tk_eff * tn_eff * w_itemsize
                  + 3 * tm * tn_eff * 4)
    vmem_limit = int(min(max(tile_bytes + (4 << 20), 16 << 20), 32 << 20))

    @jax.jit
    def apply(x):
        M, Kx = x.shape
        assert Kx == K, "input feature dim mismatch"
        out_dtype = x.dtype
        if compute_dtype is not None:
            x = x.astype(compute_dtype)
        if Kp != K:
            # Only hit when K > tk and not a tile multiple (rare for real dims).
            x = jnp.pad(x, ((0, 0), (0, Kp - K)))
        tm_eff = M if M <= tm else _round_up(tm, _sublane(x.dtype))
        grid = (pl.cdiv(M, tm_eff), pl.cdiv(N, tn_eff), Kp // tk_eff)

        in_specs = [
            pl.BlockSpec((tm_eff, tk_eff), lambda i, j, k: (i, k)),   # x tile
            pl.BlockSpec((tk_eff, tn_eff), lambda i, j, k: (k, j)),   # (K, N) weight tile
            pl.BlockSpec((1, tn_eff), lambda i, j, k: (0, j)),        # bias: N-indexed only
        ]
        out_spec = pl.BlockSpec((tm_eff, tn_eff), lambda i, j, k: (i, j))

        if out_dtype == jnp.float32:
            kernel, scratch = _tiled_kernel_f32_out, []
        else:
            kernel = _tiled_kernel_acc
            scratch = [pltpu.VMEM((tm_eff, tn_eff), jnp.float32)]

        return pl.pallas_call(
            kernel,
            out_shape=jax.ShapeDtypeStruct((M, N), out_dtype),
            grid_spec=pltpu.PrefetchScalarGridSpec(
                num_scalar_prefetch=0,
                grid=grid,
                in_specs=in_specs,
                out_specs=out_spec,
                scratch_shapes=scratch,
            ),
            compiler_params=pltpu.CompilerParams(
                dimension_semantics=("parallel", "parallel", "arbitrary"),
                vmem_limit_bytes=vmem_limit,
            ),
        )(x, wt_p, b2)

    return apply


# Convenience one-shot wrapper (prep + apply). Prefer make_embedding_projector
# + cached apply() in real use so parameter prep is not on the hot path.
def embedding_projector(x, weight, bias, **kwargs):
    return make_embedding_projector(weight, bias, **kwargs)(x)


if __name__ == "__main__":
    key = jax.random.PRNGKey(0)
    k1, k2, k3 = jax.random.split(key, 3)

    # Small shapes consistent with the module (batch of embeddings -> projection).
    batch = 16
    input_dim = 288
    output_dim = 192

    x = jax.random.normal(k1, (batch, input_dim), dtype=jnp.float32)
    weight = jax.random.normal(k2, (output_dim, input_dim), dtype=jnp.float32) * 0.05
    bias = jax.random.normal(k3, (output_dim,), dtype=jnp.float32) * 0.05

    # Reference (matches torch.nn.Linear forward semantics).
    y_ref = x @ weight.T + bias

    # Fast path: whole weight resident in VMEM, 1-D grid over the batch.
    project = make_embedding_projector(weight, bias)
    y = jax.block_until_ready(project(x))
    assert y.shape == (batch, output_dim)
    assert jnp.allclose(y, y_ref, atol=1e-4, rtol=1e-5), float(jnp.max(jnp.abs(y - y_ref)))

    # Tiled fallback path (used for weights too large to hold resident);
    # exercises the (M, N, K) reduction grid and the f32-output accumulator.
    project_tiled = make_embedding_projector(weight, bias, force_tiled=True)
    y2 = jax.block_until_ready(project_tiled(x))
    assert jnp.allclose(y2, y_ref, atol=1e-4, rtol=1e-5), float(jnp.max(jnp.abs(y2 - y_ref)))

    print("KERNEL_OK")
</pallas_src>

<mosaic_0001>
module attributes {stable_mosaic.version = 11 : i64} {
  func.func @_resident_kernel(%arg0: i32, %arg1: memref<16x288xf32, #tpu.memory_space<vmem>>, %arg2: memref<288x192xf32, #tpu.memory_space<vmem>>, %arg3: memref<1x192xf32, #tpu.memory_space<vmem>>, %arg4: memref<16x192xf32, #tpu.memory_space<vmem>>) attributes {dimension_semantics = [#tpu.dimension_semantics<parallel>], iteration_bounds = array<i64: 1>, scalar_prefetch = 0 : i64, scratch_operands = 0 : i64, tpu.core_type = #tpu.core_type<tc>, window_params = [{transform_indices = @transform_0, window_bounds = array<i64: 16, 288>}, {pipeline_mode = #tpu.pipeline_mode<synchronous>, transform_indices = @transform_1, window_bounds = array<i64: 288, 192>}, {pipeline_mode = #tpu.pipeline_mode<synchronous>, transform_indices = @transform_2, window_bounds = array<i64: 1, 192>}, {transform_indices = @transform_3, window_bounds = array<i64: 16, 192>}]} {
    %c0 = arith.constant 0 : index
    %c0_0 = arith.constant 0 : index
    %0 = vector.load %arg1[%c0, %c0_0] : memref<16x288xf32, #tpu.memory_space<vmem>>, vector<16x288xf32>
    %c0_1 = arith.constant 0 : index
    %c0_2 = arith.constant 0 : index
    %1 = vector.load %arg2[%c0_1, %c0_2] : memref<288x192xf32, #tpu.memory_space<vmem>>, vector<288x192xf32>
    %cst = arith.constant dense<0.000000e+00> : vector<16x192xf32>
    %2 = tpu.matmul %0, %1, %cst {dimension_numbers = #tpu.dot_dimension_numbers<[1], [0], [0], [1], [0, 0, 1, 1], [], []>} : vector<16x288xf32>, vector<288x192xf32>, vector<16x192xf32> -> vector<16x192xf32>
    %c0_3 = arith.constant 0 : index
    %c0_4 = arith.constant 0 : index
    %3 = vector.load %arg3[%c0_3, %c0_4] : memref<1x192xf32, #tpu.memory_space<vmem>>, vector<1x192xf32>
    %4 = vector.broadcast %3 : vector<1x192xf32> to vector<16x192xf32>
    %5 = arith.addf %2, %4 : vector<16x192xf32>
    %c0_5 = arith.constant 0 : index
    %c0_6 = arith.constant 0 : index
    %6 = vector.load %arg4[%c0_5, %c0_6] : memref<16x192xf32, #tpu.memory_space<vmem>>, vector<16x192xf32>
    tpu.vector_store %arg4[%c0_5, %c0_6], %5 {strides = array<i32>} : memref<16x192xf32, #tpu.memory_space<vmem>>, vector<16x192xf32>,
    return
  }
  func.func @transform_0(%arg0: i32) -> (i32, i32) {
    %c0_i32 = arith.constant 0 : i32
    %c0_i32_0 = arith.constant 0 : i32
    return %arg0, %c0_i32 : i32, i32
  }
  func.func @transform_1(%arg0: i32) -> (i32, i32) {
    %c0_i32 = arith.constant 0 : i32
    %c0_i32_0 = arith.constant 0 : i32
    %c0_i32_1 = arith.constant 0 : i32
    return %c0_i32, %c0_i32_0 : i32, i32
  }
  func.func @transform_2(%arg0: i32) -> (i32, i32) {
    %c0_i32 = arith.constant 0 : i32
    %c0_i32_0 = arith.constant 0 : i32
    %c0_i32_1 = arith.constant 0 : i32
    return %c0_i32, %c0_i32_0 : i32, i32
  }
  func.func @transform_3(%arg0: i32) -> (i32, i32) {
    %c0_i32 = arith.constant 0 : i32
    %c0_i32_0 = arith.constant 0 : i32
    return %arg0, %c0_i32 : i32, i32
  }
}

</mosaic_0001>

<llo_original>
// kernel: apply.1
$region0: #{apply.1}
  #allocation0 [shape = 'u32[]', space=smem, size = 0x4, offset = 0x4, fixed_abs, tag = 'smem constant byte address 0x4 - core index']
  #allocation1 [shape = 'u32[72,128]{1,0:T(1,128)}', space=vmem, size = 0x9000, scoped, tag = 'internal scratch']
  %s0 = inlined_call_operand.hbm [shape: f32[16,288], index: 0, kind: input, shape index: {}]
  %s1 = inlined_call_operand.hbm [shape: f32[288,192], index: 1, kind: input, shape index: {}]
  %s2 = inlined_call_operand.hbm [shape: f32[1,192], index: 2, kind: input, shape index: {}]
  %s3 = inlined_call_operand.hbm [shape: f32[16,192], index: 3, kind: output, shape index: {}]
  %s4 = sld [smem:[#allocation0]]
  $region34: #{apply.1} parent=0
    _
  %s6 = ssub.s32 1, %s4
  %s7 = scalar_select 0, %s6, %s4
  $region1: #{apply.1} parent=0
    #allocation2 [shape = 'u8[24576]{0}', space=vmem, size = 0x6000, scoped, tag = 'input window, operand 0, single buffered']
    #allocation3 [shape = 's32[1]{0}', space=sflag, size = 0x4, scoped, tag = 'scoped memory for apply.1']
    #allocation4 [shape = 's32[1]{0}', space=sflag, size = 0x4, scoped, tag = 'scoped memory for apply.1']
    #allocation5 [shape = 'u8[294912]{0}', space=vmem, size = 0x48000, scoped, tag = 'input window, operand 1, single buffered']
    #allocation6 [shape = 's32[1]{0}', space=sflag, size = 0x4, scoped, tag = 'scoped memory for apply.1']
    #allocation7 [shape = 'u8[1024]{0}', space=vmem, size = 0x400, scoped, tag = 'input window, operand 2, single buffered']
    #allocation8 [shape = 'u8[16384]{0}', space=vmem, size = 0x4000, scoped, tag = 'output window, operand 0, single buffered']
    %8 = vsyncpa [#allocation3], 0
    %9 = vsyncpa [#allocation6], 0
    %10 = vsyncpa [#allocation4], 0
    // Predicated region
    $region2: #{apply.1} parent=1 // pred_check
      _
    $region3: #{apply.1} parent=1 // pred_check_branch
      %12 = sbr.rel (0) target = $region5
    $region4: #{apply.1} parent=1 // pred_region
      %14 = vsyncadd [#allocation3], 0
      %s15 = sshll.u32 %s0, 4
      %s16 = int_to_ptr.hbm [resolvable:$true] %s15
      %s17 = sshll.u32 [#allocation2], 4
      %s18 = int_to_ptr.vmem [resolvable:$true] %s17
      %23 = dma.hbm_to_vmem [thread:$0]  %s16, 768, %s18, [#allocation3], 384, 384, 24
    $region5: #{apply.1} parent=1 // pred_fallthru
      _
    // Predicated region
    $region6: #{apply.1} parent=1 // pred_check
      _
    $region7: #{apply.1} parent=1 // pred_check_branch
      %25 = sbr.rel (0) target = $region9
    $region8: #{apply.1} parent=1 // pred_region
      %27 = vsyncadd [#allocation6], 0
      %s28 = sshll.u32 %s1, 4
      %s29 = int_to_ptr.hbm [resolvable:$true] %s28
      %s30 = sshll.u32 [#allocation5], 4
      %s31 = int_to_ptr.vmem [resolvable:$true] %s30
      %36 = dma.hbm_to_vmem [thread:$0]  %s29, 9216, %s31, [#allocation6], 256, 256, 16
    $region9: #{apply.1} parent=1 // pred_fallthru
      _
    // Predicated region
    $region10: #{apply.1} parent=1 // pred_check
      _
    $region11: #{apply.1} parent=1 // pred_check_branch
      %38 = sbr.rel (0) target = $region13
    $region12: #{apply.1} parent=1 // pred_region
      %40 = vsyncadd [#allocation6], 0
      %s42 = sshll.u32 %s2, 4
      %s43 = int_to_ptr.hbm [resolvable:$true] %s42
      %s44 = sshll.u32 [#allocation7], 4
      %s45 = int_to_ptr.vmem [resolvable:$true] %s44
      %47 = dma.hbm_to_vmem [thread:$0]  %s43, 32, %s45, [#allocation6]
    $region13: #{apply.1} parent=1 // pred_fallthru
      _
    // Predicated region
    $region14: #{apply.1} parent=1 // pred_check
      _
    $region15: #{apply.1} parent=1 // pred_check_branch
      %49 = sbr.rel (0) target = $region17
    $region16: #{apply.1} parent=1 // pred_region
      %51 = dma.done [#allocation3], 768
    $region17: #{apply.1} parent=1 // pred_fallthru
      _
    // Predicated region
    $region18: #{apply.1} parent=1 // pred_check
      _
    $region19: #{apply.1} parent=1 // pred_check_branch
      %53 = sbr.rel (0) target = $region21
    $region20: #{apply.1} parent=1 // pred_region
      %55 = dma.done [#allocation6], 9216
    $region21: #{apply.1} parent=1 // pred_fallthru
      _
    // Predicated region
    $region22: #{apply.1} parent=1 // pred_check
      _
    $region23: #{apply.1} parent=1 // pred_check_branch
      %57 = sbr.rel (0) target = $region25
    $region24: #{apply.1} parent=1 // pred_region
      %59 = dma.done [#allocation6], 32
    $region25: #{apply.1} parent=1 // pred_fallthru
      _
    %v60 = vld [vmem:[#allocation2] sm:$0xff]
    %v61 = vld [vmem:[#allocation2 + $0x8] sm:$0xff]
    %v62 = vld [vmem:[#allocation2 + $0x10] sm:$0xff]
    %v63 = vld [vmem:[#allocation2 + $0x18] sm:$0xff]
    %v64 = vld [vmem:[#allocation2 + $0x20] sm:$0xff]
    %v65 = vld [vmem:[#allocation2 + $0x28] sm:$0xff]
    %v66 = vld [vmem:[#allocation5] sm:$0xff]
    %v67 = vld [vmem:[#allocation5 + $0x8] sm:$0xff]
    %v68 = vld [vmem:[#allocation5 + $0x10] sm:$0xff]
    %v69 = vld [vmem:[#allocation5 + $0x18] sm:$0xff]
    %v70 = vld [vmem:[#allocation5 + $0x20] sm:$0xff]
    %v71 = vld [vmem:[#allocation5 + $0x28] sm:$0xff]
    %v72 = vld [vmem:[#allocation5 + $0x30] sm:$0xff]
    %v73 = vld [vmem:[#allocation5 + $0x38] sm:$0xff]
    %v74 = vld [vmem:[#allocation5 + $0x40] sm:$0xff]
    %v75 = vld [vmem:[#allocation5 + $0x48] sm:$0xff]
    %v76 = vld [vmem:[#allocation5 + $0x50] sm:$0xff]
    %v77 = vld [vmem:[#allocation5 + $0x58] sm:$0xff]
    %v78 = vld [vmem:[#allocation5 + $0x60] sm:$0xff]
    %v79 = vld [vmem:[#allocation5 + $0x68] sm:$0xff]
    %v80 = vld [vmem:[#allocation5 + $0x70] sm:$0xff]
    %v81 = vld [vmem:[#allocation5 + $0x78] sm:$0xff]
    %v82 = vld [vmem:[#allocation5 + $0x80] sm:$0xff]
    %v83 = vld [vmem:[#allocation5 + $0x88] sm:$0xff]
    %v84 = vld [vmem:[#allocation5 + $0x90] sm:$0xff]
    %v85 = vld [vmem:[#allocation5 + $0x98] sm:$0xff]
    %v86 = vld [vmem:[#allocation5 + $0xa0] sm:$0xff]
    %v87 = vld [vmem:[#allocation5 + $0xa8] sm:$0xff]
    %v88 = vld [vmem:[#allocation5 + $0xb0] sm:$0xff]
    %v89 = vld [vmem:[#allocation5 + $0xb8] sm:$0xff]
    %v90 = vld [vmem:[#allocation5 + $0xc0] sm:$0xff]
    %v91 = vld [vmem:[#allocation5 + $0xc8] sm:$0xff]
    %v92 = vld [vmem:[#allocation5 + $0xd0] sm:$0xff]
    %v93 = vld [vmem:[#allocation5 + $0xd8] sm:$0xff]
    %v94 = vld [vmem:[#allocation5 + $0xe0] sm:$0xff]
    %v95 = vld [vmem:[#allocation5 + $0xe8] sm:$0xff]
    %v96 = vld [vmem:[#allocation5 + $0xf0] sm:$0xff]
    %v97 = vld [vmem:[#allocation5 + $0xf8] sm:$0xff]
    %v98 = vld [vmem:[#allocation5 + $0x100] sm:$0xff]
    %v99 = vld [vmem:[#allocation5 + $0x108] sm:$0xff]
    %v100 = vld [vmem:[#allocation5 + $0x110] sm:$0xff]
    %v101 = vld [vmem:[#allocation5 + $0x118] sm:$0xff]
    %v102 = vld [vmem:[#allocation5 + $0x120] sm:$0xff]
    %v103 = vld [vmem:[#allocation5 + $0x128] sm:$0xff]
    %v104 = vld [vmem:[#allocation5 + $0x130] sm:$0xff]
    %v105 = vld [vmem:[#allocation5 + $0x138] sm:$0xff]
    %v106 = vld [vmem:[#allocation5 + $0x140] sm:$0xff]
    %v107 = vld [vmem:[#allocation5 + $0x148] sm:$0xff]
    %v108 = vld [vmem:[#allocation5 + $0x150] sm:$0xff]
    %v109 = vld [vmem:[#allocation5 + $0x158] sm:$0xff]
    %v110 = vld [vmem:[#allocation5 + $0x160] sm:$0xff]
    %v111 = vld [vmem:[#allocation5 + $0x168] sm:$0xff]
    %v112 = vld [vmem:[#allocation5 + $0x170] sm:$0xff]
    %v113 = vld [vmem:[#allocation5 + $0x178] sm:$0xff]
    %v114 = vld [vmem:[#allocation5 + $0x180] sm:$0xff]
    %v115 = vld [vmem:[#allocation5 + $0x188] sm:$0xff]
    %v116 = vld [vmem:[#allocation5 + $0x190] sm:$0xff]
    %v117 = vld [vmem:[#allocation5 + $0x198] sm:$0xff]
    %v118 = vld [vmem:[#allocation5 + $0x1a0] sm:$0xff]
    %v119 = vld [vmem:[#allocation5 + $0x1a8] sm:$0xff]
    %v120 = vld [vmem:[#allocation5 + $0x1b0] sm:$0xff]
    %v121 = vld [vmem:[#allocation5 + $0x1b8] sm:$0xff]
    %v122 = vld [vmem:[#allocation5 + $0x1c0] sm:$0xff]
    %v123 = vld [vmem:[#allocation5 + $0x1c8] sm:$0xff]
    %v124 = vld [vmem:[#allocation5 + $0x1d0] sm:$0xff]
    %v125 = vld [vmem:[#allocation5 + $0x1d8] sm:$0xff]
    %v126 = vld [vmem:[#allocation5 + $0x1e0] sm:$0xff]
    %v127 = vld [vmem:[#allocation5 + $0x1e8] sm:$0xff]
    %v128 = vld [vmem:[#allocation5 + $0x1f0] sm:$0xff]
    %v129 = vld [vmem:[#allocation5 + $0x1f8] sm:$0xff]
    %v130 = vld [vmem:[#allocation5 + $0x200] sm:$0xff]
    %v131 = vld [vmem:[#allocation5 + $0x208] sm:$0xff]
    %v132 = vld [vmem:[#allocation5 + $0x210] sm:$0xff]
    %v133 = vld [vmem:[#allocation5 + $0x218] sm:$0xff]
    %v134 = vld [vmem:[#allocation5 + $0x220] sm:$0xff]
    %v135 = vld [vmem:[#allocation5 + $0x228] sm:$0xff]
    %v136 = vld [vmem:[#allocation5 + $0x230] sm:$0xff]
    %v137 = vld [vmem:[#allocation5 + $0x238] sm:$0xff]
    %v138 = vld [vmem:[#allocation7] sm:$0x3]
    %v140 = vperm.slane %v138, 0
    %v141 = vperm.slane %v138, 1
    %vm144 = vcmask 261120
    %v146 = vsel %vm144, %v62, 0
    %v149 = vsel %vm144, %v65, 0
    %151 = vmatpush.msra.mxu0 %v96
    %152 = vmatpush.msra.mxu0 %v94
    %153 = vmatpush.msra.mxu0 %v92
    %154 = vmatpush.msra.mxu0 %v90
    %155 = vmatpush.msra.mxu0 %v88
    %156 = vmatpush.msra.mxu0 %v86
    %157 = vmatpush.msra.mxu0 %v84
    %158 = vmatpush.msra.mxu0 %v82
    %159 = vmatpush.msra.mxu0 %v80
    %160 = vmatpush.msra.mxu0 %v78
    %161 = vmatpush.msra.mxu0 %v76
    %162 = vmatpush.msra.mxu0 %v74
    %163 = vmatpush.msra.mxu0 %v72
    %164 = vmatpush.msra.mxu0 %v70
    %165 = vmatpush.msra.mxu0 %v68
    %166 = vmatpush.msra.mxu0 %v66
    %167 = vmatmul.f32.gmra.mxu0 %v60
    %v168 = vpop.f32.mrf.mxu0
    %v169 = vadd.f32 %v140, %v168
    %170 = vmatmul.f32.gmra.mxu0 %v63
    %v171 = vpop.f32.mrf.mxu0
    %v172 = vadd.f32 %v140, %v171
    %173 = vdwg.mxu0
    %174 = vmatpush.msra.mxu0 %v128
    %175 = vmatpush.msra.mxu0 %v126
    %176 = vmatpush.msra.mxu0 %v124
    %177 = vmatpush.msra.mxu0 %v122
    %178 = vmatpush.msra.mxu0 %v120
    %179 = vmatpush.msra.mxu0 %v118
    %180 = vmatpush.msra.mxu0 %v116
    %181 = vmatpush.msra.mxu0 %v114
    %182 = vmatpush.msra.mxu0 %v112
    %183 = vmatpush.msra.mxu0 %v110
    %184 = vmatpush.msra.mxu0 %v108
    %185 = vmatpush.msra.mxu0 %v106
    %186 = vmatpush.msra.mxu0 %v104
    %187 = vmatpush.msra.mxu0 %v102
    %188 = vmatpush.msra.mxu0 %v100
    %189 = vmatpush.msra.mxu0 %v98
    %190 = vmatmul.f32.gmra.mxu0 %v61
    %v191 = vpop.f32.mrf.mxu0
    %v192 = vadd.f32 %v169, %v191
    %193 = vmatmul.f32.gmra.mxu0 %v64
    %v194 = vpop.f32.mrf.mxu0
    %v195 = vadd.f32 %v172, %v194
    %196 = vdwg.mxu0
    %197 = vmatpush.msra.mxu0 0.0
    %198 = vmatpush.msra.mxu0 0.0
    %199 = vmatpush.msra.mxu0 0.0
    %200 = vmatpush.msra.mxu0 0.0
    %201 = vmatpush.msra.mxu0 0.0
    %202 = vmatpush.msra.mxu0 0.0
    %203 = vmatpush.msra.mxu0 0.0
    %204 = vmatpush.msra.mxu0 0.0
    %205 = vmatpush.msra.mxu0 0.0
    %206 = vmatpush.msra.mxu0 0.0
    %207 = vmatpush.msra.mxu0 0.0
    %208 = vmatpush.msra.mxu0 0.0
    %209 = vmatpush.msra.mxu0 %v136
    %210 = vmatpush.msra.mxu0 %v134
    %211 = vmatpush.msra.mxu0 %v132
    %212 = vmatpush.msra.mxu0 %v130
    %213 = vmatmul.f32.gmra.mxu0 %v146
    %v214 = vpop.f32.mrf.mxu0
    %v215 = vadd.f32 %v192, %v214
    %216 = vmatmul.f32.gmra.mxu0 %v149
    %v217 = vpop.f32.mrf.mxu0
    %v218 = vadd.f32 %v195, %v217
    %219 = vdwg.mxu0
    %220 = vmatpush.msra.mxu0 %v97
    %221 = vmatpush.msra.mxu0 %v95
    %222 = vmatpush.msra.mxu0 %v93
    %223 = vmatpush.msra.mxu0 %v91
    %224 = vmatpush.msra.mxu0 %v89
    %225 = vmatpush.msra.mxu0 %v87
    %226 = vmatpush.msra.mxu0 %v85
    %227 = vmatpush.msra.mxu0 %v83
    %228 = vmatpush.msra.mxu0 %v81
    %229 = vmatpush.msra.mxu0 %v79
    %230 = vmatpush.msra.mxu0 %v77
    %231 = vmatpush.msra.mxu0 %v75
    %232 = vmatpush.msra.mxu0 %v73
    %233 = vmatpush.msra.mxu0 %v71
    %234 = vmatpush.msra.mxu0 %v69
    %235 = vmatpush.msra.mxu0 %v67
    %236 = vmatmul.f32.gmra.mxu0 %v60
    %v237 = vpop.f32.mrf.mxu0
    %v238 = vadd.f32 %v141, %v237
    %239 = vmatmul.f32.gmra.mxu0 %v63
    %v240 = vpop.f32.mrf.mxu0
    %v241 = vadd.f32 %v141, %v240
    %242 = vdwg.mxu0
    %243 = vmatpush.msra.mxu0 %v129
    %244 = vmatpush.msra.mxu0 %v127
    %245 = vmatpush.msra.mxu0 %v125
    %246 = vmatpush.msra.mxu0 %v123
    %247 = vmatpush.msra.mxu0 %v121
    %248 = vmatpush.msra.mxu0 %v119
    %249 = vmatpush.msra.mxu0 %v117
    %250 = vmatpush.msra.mxu0 %v115
    %251 = vmatpush.msra.mxu0 %v113
    %252 = vmatpush.msra.mxu0 %v111
    %253 = vmatpush.msra.mxu0 %v109
    %254 = vmatpush.msra.mxu0 %v107
    %255 = vmatpush.msra.mxu0 %v105
    %256 = vmatpush.msra.mxu0 %v103
    %257 = vmatpush.msra.mxu0 %v101
    %258 = vmatpush.msra.mxu0 %v99
    %259 = vmatmul.f32.gmra.mxu0 %v61
    %v260 = vpop.f32.mrf.mxu0
    %v261 = vadd.f32 %v238, %v260
    %262 = vmatmul.f32.gmra.mxu0 %v64
    %v263 = vpop.f32.mrf.mxu0
    %v264 = vadd.f32 %v241, %v263
    %265 = vdwg.mxu0
    %266 = vmatpush.msra.mxu0 0.0
    %267 = vmatpush.msra.mxu0 0.0
    %268 = vmatpush.msra.mxu0 0.0
    %269 = vmatpush.msra.mxu0 0.0
    %270 = vmatpush.msra.mxu0 0.0
    %271 = vmatpush.msra.mxu0 0.0
    %272 = vmatpush.msra.mxu0 0.0
    %273 = vmatpush.msra.mxu0 0.0
    %274 = vmatpush.msra.mxu0 0.0
    %275 = vmatpush.msra.mxu0 0.0
    %276 = vmatpush.msra.mxu0 0.0
    %277 = vmatpush.msra.mxu0 0.0
    %278 = vmatpush.msra.mxu0 %v137
    %279 = vmatpush.msra.mxu0 %v135
    %280 = vmatpush.msra.mxu0 %v133
    %281 = vmatpush.msra.mxu0 %v131
    %282 = vmatmul.f32.gmra.mxu0 %v146
    %v283 = vpop.f32.mrf.mxu0
    %v284 = vadd.f32 %v261, %v283
    %285 = vmatmul.f32.gmra.mxu0 %v149
    %v286 = vpop.f32.mrf.mxu0
    %v287 = vadd.f32 %v264, %v286
    %288 = vdwg.mxu0
    %289 = vst [vmem:[#allocation8] sm:$0xff] %v215
    %vm290 = vcmask 523264
    %291 = vst.msk [vmem:[#allocation8 + $0x8] sm:$0xff] %vm290, %v284
    %292 = vst [vmem:[#allocation8 + $0x10] sm:$0xff] %v218
    %293 = vst.msk [vmem:[#allocation8 + $0x18] sm:$0xff] %vm290, %v287
    // Predicated region
    $region26: #{apply.1} parent=1 // pred_check
      _
    $region27: #{apply.1} parent=1 // pred_check_branch
      %295 = sbr.rel (0) target = $region29
    $region28: #{apply.1} parent=1 // pred_region
      %297 = vsyncadd [#allocation4], 0
      %s298 = sshll.u32 [#allocation8], 4
      %s299 = int_to_ptr.vmem [resolvable:$true] %s298
      %s300 = sshll.u32 %s3, 4
      %s301 = int_to_ptr.hbm [resolvable:$true] %s300
      %306 = dma.vmem_to_hbm [thread:$0]  %s299, 512, %s301, [#allocation4], 256, 256, 16
    $region29: #{apply.1} parent=1 // pred_fallthru
      _
    // Predicated region
    $region30: #{apply.1} parent=1 // pred_check
      _
    $region31: #{apply.1} parent=1 // pred_check_branch
      %308 = sbr.rel (0) target = $region33
    $region32: #{apply.1} parent=1 // pred_region
      %310 = dma.done [#allocation4], 512
    $region33: #{apply.1} parent=1 // pred_fallthru
      _
    %311 = vsyncpa [#allocation3], 1
    %312 = vsyncpa [#allocation6], 1
    %313 = vsyncpa [#allocation4], 1

</llo_original>
